<compile_context>
chip_gen: v5e
topology: v5e:2x2
jax: 0.10.0
libtpu: 0.0.40
codegen_flags: <defaults>
</compile_context>

<pallas_src>
import jax
import jax.numpy as jnp
from jax import lax
from jax.experimental import pallas as pl
from jax.experimental.pallas import tpu as pltpu
import numpy as np


def _res_layer1d_kernel(xp_ref, w1_ref, b1_ref, w2_ref, b2_ref, o_ref):
    # xp_ref block: (1, C, L+4) -- one batch element, x with a 2-col zero halo.
    xp = xp_ref[0]                       # (C, L+4) f32
    C, Lp4 = xp.shape
    L = Lp4 - 4
    Lh = L + 2                           # conv1 is evaluated on a 1-col halo

    def conv3(stacked_bf16, w_ref, b_ref):
        # stacked_bf16: (3C, W) taps stacked on the contraction axis.
        # w_ref: (C, 3C) bf16, b_ref: (C, 1) f32.  One fused MXU matmul.
        y = jnp.dot(w_ref[...], stacked_bf16,
                    preferred_element_type=jnp.float32)      # (C, W) f32
        return y + b_ref[...]

    # ---- conv1 + ReLU on the halo domain (width L+2) ----------------------
    # tap k needs x[l + k - 1]; with the 2-col host halo these are plain
    # static lane slices of xp.
    s1 = jnp.concatenate(
        [xp[:, 0:Lh], xp[:, 1:1 + Lh], xp[:, 2:2 + Lh]], axis=0
    ).astype(jnp.bfloat16)                                    # (3C, L+2)
    h = jnp.maximum(conv3(s1, w1_ref, b1_ref), 0.0)           # (C, L+2) f32

    # Zero the halo columns so conv2 sees an exactly zero-padded input.
    lane = lax.broadcasted_iota(jnp.int32, (C, Lh), 1)
    h = jnp.where((lane == 0) | (lane == Lh - 1), 0.0, h)

    # ---- conv2 -------------------------------------------------------------
    s2 = jnp.concatenate(
        [h[:, 0:L], h[:, 1:1 + L], h[:, 2:2 + L]], axis=0
    ).astype(jnp.bfloat16)                                    # (3C, L)
    y = conv3(s2, w2_ref, b2_ref)                             # (C, L) f32

    # ---- residual + ReLU (f32 x, not the bf16 copy) ------------------------
    o_ref[0] = jnp.maximum(y + xp[:, 2:2 + L], 0.0)


def res_layer1d_pallas(x, params):
    """x: (B, C, L) float32 (PyTorch NCL). Returns (B, C, L) float32."""
    w1, b1, w2, b2 = params              # w: (Cout, Cin, 3), b: (Cout,)
    B, C, L = x.shape

    # 2-column zero halo on L (covers both stacked k=3 convs).
    x_pad = jnp.pad(x.astype(jnp.float32), ((0, 0), (0, 0), (2, 2)))

    def stack_w(w):
        # (Cout, Cin, 3) -> (Cout, 3*Cin), tap-major blocks [k=0 | k=1 | k=2],
        # matching the tap stacking done inside the kernel.
        return jnp.concatenate([w[:, :, 0], w[:, :, 1], w[:, :, 2]], axis=1)

    w1s = stack_w(w1).astype(jnp.bfloat16)     # bf16 MXU path, f32 accumulation
    w2s = stack_w(w2).astype(jnp.bfloat16)
    b1c = b1.reshape(C, 1).astype(jnp.float32)
    b2c = b2.reshape(C, 1).astype(jnp.float32)

    full2 = lambda shape: pl.BlockSpec(shape, lambda b: (0, 0))

    return pl.pallas_call(
        _res_layer1d_kernel,
        out_shape=jax.ShapeDtypeStruct((B, C, L), jnp.float32),
        grid_spec=pltpu.PrefetchScalarGridSpec(
            num_scalar_prefetch=0,
            grid=(B,),
            in_specs=[
                pl.BlockSpec((1, C, L + 4), lambda b: (b, 0, 0)),  # x (haloed)
                full2((C, 3 * C)),                                 # conv1 weight
                full2((C, 1)),                                     # conv1 bias
                full2((C, 3 * C)),                                 # conv2 weight
                full2((C, 1)),                                     # conv2 bias
            ],
            out_specs=pl.BlockSpec((1, C, L), lambda b: (b, 0, 0)),
        ),
        compiler_params=pltpu.CompilerParams(
            dimension_semantics=("parallel",),
            vmem_limit_bytes=32 * 1024 * 1024,
        ),
    )(x_pad, w1s, b1c, w2s, b2c)


# ----------------------------- pure-JAX reference ----------------------------

def _conv1d_ref(v, w, b):
    """PyTorch Conv1d(k=3, stride=1, padding=1) cross-correlation. v: (B,C,L)."""
    B, C, L = v.shape
    vp = jnp.pad(v, ((0, 0), (0, 0), (1, 1)))
    taps = jnp.stack([vp[:, :, k:k + L] for k in range(3)], axis=-1)  # (B,Cin,L,3)
    return jnp.einsum('oik,bilk->bol', w, taps) + b[None, :, None]


def res_layer1d_reference(x, params):
    w1, b1, w2, b2 = params
    h = jax.nn.relu(_conv1d_ref(x, w1, b1))
    y = _conv1d_ref(h, w2, b2)
    return jax.nn.relu(y + x)


def init_params(key, n, kernel_size=3):
    k1, k2, k3, k4 = jax.random.split(key, 4)
    scale = 0.1
    w1 = scale * jax.random.normal(k1, (n, n, kernel_size), jnp.float32)
    b1 = scale * jax.random.normal(k2, (n,), jnp.float32)
    w2 = scale * jax.random.normal(k3, (n, n, kernel_size), jnp.float32)
    b2 = scale * jax.random.normal(k4, (n,), jnp.float32)
    return (w1, b1, w2, b2)


if __name__ == "__main__":
    B, C, L = 2, 16, 32          # module default n=16, small sequence
    key = jax.random.PRNGKey(0)
    kx, kp = jax.random.split(key)
    x = jax.random.normal(kx, (B, C, L), jnp.float32)
    params = init_params(kp, C)

    out = jax.block_until_ready(res_layer1d_pallas(x, params))
    ref = jax.block_until_ready(res_layer1d_reference(x, params))

    # bf16 MXU inputs with f32 accumulation -> bf16-level tolerance.
    np.testing.assert_allclose(np.asarray(out), np.asarray(ref),
                               rtol=3e-2, atol=3e-2)
    assert out.shape == (B, C, L)

    print("KERNEL_OK")
</pallas_src>

<mosaic_0001>
module attributes {stable_mosaic.version = 11 : i64} {
  func.func @_res_layer1d_kernel(%arg0: i32, %arg1: memref<1x16x36xf32, #tpu.memory_space<vmem>>, %arg2: memref<16x48xbf16, #tpu.memory_space<vmem>>, %arg3: memref<16x1xf32, #tpu.memory_space<vmem>>, %arg4: memref<16x48xbf16, #tpu.memory_space<vmem>>, %arg5: memref<16x1xf32, #tpu.memory_space<vmem>>, %arg6: memref<1x16x32xf32, #tpu.memory_space<vmem>>) attributes {dimension_semantics = [#tpu.dimension_semantics<parallel>], iteration_bounds = array<i64: 2>, scalar_prefetch = 0 : i64, scratch_operands = 0 : i64, tpu.core_type = #tpu.core_type<tc>, window_params = [{transform_indices = @transform_0, window_bounds = array<i64: 1, 16, 36>}, {pipeline_mode = #tpu.pipeline_mode<synchronous>, transform_indices = @transform_1, window_bounds = array<i64: 16, 48>}, {pipeline_mode = #tpu.pipeline_mode<synchronous>, transform_indices = @transform_2, window_bounds = array<i64: 16, 1>}, {pipeline_mode = #tpu.pipeline_mode<synchronous>, transform_indices = @transform_3, window_bounds = array<i64: 16, 48>}, {pipeline_mode = #tpu.pipeline_mode<synchronous>, transform_indices = @transform_4, window_bounds = array<i64: 16, 1>}, {transform_indices = @transform_5, window_bounds = array<i64: 1, 16, 32>}]} {
    %c0 = arith.constant 0 : index
    %c0_0 = arith.constant 0 : index
    %c0_1 = arith.constant 0 : index
    %0 = vector.load %arg1[%c0, %c0_0, %c0_1] : memref<1x16x36xf32, #tpu.memory_space<vmem>>, vector<1x16x36xf32>
    %1 = vector.shape_cast %0 : vector<1x16x36xf32> to vector<16x36xf32>
    %2 = vector.extract_strided_slice %1 {offsets = [0, 0], sizes = [16, 34], strides = [1, 1]} : vector<16x36xf32> to vector<16x34xf32>
    %3 = vector.extract_strided_slice %1 {offsets = [0, 1], sizes = [16, 34], strides = [1, 1]} : vector<16x36xf32> to vector<16x34xf32>
    %4 = vector.extract_strided_slice %1 {offsets = [0, 2], sizes = [16, 34], strides = [1, 1]} : vector<16x36xf32> to vector<16x34xf32>
    %5 = tpu.concatenate %2, %3, %4 in 0 : vector<16x34xf32>, vector<16x34xf32>, vector<16x34xf32> -> vector<48x34xf32>
    %6 = arith.truncf %5 : vector<48x34xf32> to vector<48x34xbf16>
    %c0_2 = arith.constant 0 : index
    %c0_3 = arith.constant 0 : index
    %7 = vector.load %arg2[%c0_2, %c0_3] : memref<16x48xbf16, #tpu.memory_space<vmem>>, vector<16x48xbf16>
    %cst = arith.constant dense<0.000000e+00> : vector<16x34xf32>
    %8 = tpu.matmul %7, %6, %cst {dimension_numbers = #tpu.dot_dimension_numbers<[1], [0], [0], [1], [0, 0, 1, 1], [], []>} : vector<16x48xbf16>, vector<48x34xbf16>, vector<16x34xf32> -> vector<16x34xf32>
    %c0_4 = arith.constant 0 : index
    %c0_5 = arith.constant 0 : index
    %9 = vector.load %arg3[%c0_4, %c0_5] : memref<16x1xf32, #tpu.memory_space<vmem>>, vector<16x1xf32>
    %10 = vector.broadcast %9 : vector<16x1xf32> to vector<16x34xf32>
    %11 = arith.addf %8, %10 : vector<16x34xf32>
    %cst_6 = arith.constant 0.000000e+00 : f32
    %12 = vector.broadcast %cst_6 : f32 to vector<16x34xf32>
    %13 = arith.maximumf %11, %12 : vector<16x34xf32>
    %14 = tpu.iota {dimensions = array<i32: 1>} : vector<16x34xi32>
    %c0_i32 = arith.constant 0 : i32
    %15 = vector.broadcast %c0_i32 : i32 to vector<16x34xi32>
    %16 = arith.cmpi eq, %14, %15 : vector<16x34xi32>
    %c33_i32 = arith.constant 33 : i32
    %17 = vector.broadcast %c33_i32 : i32 to vector<16x34xi32>
    %18 = arith.cmpi eq, %14, %17 : vector<16x34xi32>
    %19 = arith.ori %16, %18 : vector<16x34xi1>
    %cst_7 = arith.constant 0.000000e+00 : f32
    %20 = vector.broadcast %cst_7 : f32 to vector<16x34xf32>
    %21 = arith.select %19, %20, %13 : vector<16x34xi1>, vector<16x34xf32>
    %22 = vector.extract_strided_slice %21 {offsets = [0, 0], sizes = [16, 32], strides = [1, 1]} : vector<16x34xf32> to vector<16x32xf32>
    %23 = vector.extract_strided_slice %21 {offsets = [0, 1], sizes = [16, 32], strides = [1, 1]} : vector<16x34xf32> to vector<16x32xf32>
    %24 = vector.extract_strided_slice %21 {offsets = [0, 2], sizes = [16, 32], strides = [1, 1]} : vector<16x34xf32> to vector<16x32xf32>
    %25 = tpu.concatenate %22, %23, %24 in 0 : vector<16x32xf32>, vector<16x32xf32>, vector<16x32xf32> -> vector<48x32xf32>
    %26 = arith.truncf %25 : vector<48x32xf32> to vector<48x32xbf16>
    %c0_8 = arith.constant 0 : index
    %c0_9 = arith.constant 0 : index
    %27 = vector.load %arg4[%c0_8, %c0_9] : memref<16x48xbf16, #tpu.memory_space<vmem>>, vector<16x48xbf16>
    %cst_10 = arith.constant dense<0.000000e+00> : vector<16x32xf32>
    %28 = tpu.matmul %27, %26, %cst_10 {dimension_numbers = #tpu.dot_dimension_numbers<[1], [0], [0], [1], [0, 0, 1, 1], [], []>} : vector<16x48xbf16>, vector<48x32xbf16>, vector<16x32xf32> -> vector<16x32xf32>
    %c0_11 = arith.constant 0 : index
    %c0_12 = arith.constant 0 : index
    %29 = vector.load %arg5[%c0_11, %c0_12] : memref<16x1xf32, #tpu.memory_space<vmem>>, vector<16x1xf32>
    %30 = vector.broadcast %29 : vector<16x1xf32> to vector<16x32xf32>
    %31 = arith.addf %28, %30 : vector<16x32xf32>
    %32 = vector.extract_strided_slice %1 {offsets = [0, 2], sizes = [16, 32], strides = [1, 1]} : vector<16x36xf32> to vector<16x32xf32>
    %33 = arith.addf %31, %32 : vector<16x32xf32>
    %cst_13 = arith.constant 0.000000e+00 : f32
    %34 = vector.broadcast %cst_13 : f32 to vector<16x32xf32>
    %35 = arith.maximumf %33, %34 : vector<16x32xf32>
    %c0_14 = arith.constant 0 : index
    %c0_15 = arith.constant 0 : index
    %c0_16 = arith.constant 0 : index
    %36 = vector.load %arg6[%c0_14, %c0_15, %c0_16] : memref<1x16x32xf32, #tpu.memory_space<vmem>>, vector<1x16x32xf32>
    %37 = vector.shape_cast %36 : vector<1x16x32xf32> to vector<16x32xf32>
    %38 = vector.shape_cast %35 : vector<16x32xf32> to vector<1x16x32xf32>
    tpu.vector_store %arg6[%c0_14, %c0_15, %c0_16], %38 {strides = array<i32>} : memref<1x16x32xf32, #tpu.memory_space<vmem>>, vector<1x16x32xf32>,
    return
  }
  func.func @transform_0(%arg0: i32) -> (i32, i32, i32) {
    %c0_i32 = arith.constant 0 : i32
    %c0_i32_0 = arith.constant 0 : i32
    %c0_i32_1 = arith.constant 0 : i32
    return %arg0, %c0_i32, %c0_i32_0 : i32, i32, i32
  }
  func.func @transform_1(%arg0: i32) -> (i32, i32) {
    %c0_i32 = arith.constant 0 : i32
    %c0_i32_0 = arith.constant 0 : i32
    %c0_i32_1 = arith.constant 0 : i32
    return %c0_i32, %c0_i32_0 : i32, i32
  }
  func.func @transform_2(%arg0: i32) -> (i32, i32) {
    %c0_i32 = arith.constant 0 : i32
    %c0_i32_0 = arith.constant 0 : i32
    %c0_i32_1 = arith.constant 0 : i32
    return %c0_i32, %c0_i32_0 : i32, i32
  }
  func.func @transform_3(%arg0: i32) -> (i32, i32) {
    %c0_i32 = arith.constant 0 : i32
    %c0_i32_0 = arith.constant 0 : i32
    %c0_i32_1 = arith.constant 0 : i32
    return %c0_i32, %c0_i32_0 : i32, i32
  }
  func.func @transform_4(%arg0: i32) -> (i32, i32) {
    %c0_i32 = arith.constant 0 : i32
    %c0_i32_0 = arith.constant 0 : i32
    %c0_i32_1 = arith.constant 0 : i32
    return %c0_i32, %c0_i32_0 : i32, i32
  }
  func.func @transform_5(%arg0: i32) -> (i32, i32, i32) {
    %c0_i32 = arith.constant 0 : i32
    %c0_i32_0 = arith.constant 0 : i32
    %c0_i32_1 = arith.constant 0 : i32
    return %arg0, %c0_i32, %c0_i32_0 : i32, i32, i32
  }
}

</mosaic_0001>

<llo_original>
// kernel: tpu_custom_call.1
$region0: #{tpu_custom_call.1}
  #allocation0 [shape = 'u32[]', space=smem, size = 0x4, offset = 0x4, fixed_abs, tag = 'smem constant byte address 0x4 - core index']
  #allocation1 [shape = 'u32[72,128]{1,0:T(1,128)}', space=vmem, size = 0x9000, scoped, tag = 'internal scratch']
  %s0 = inlined_call_operand.vmem [shape: f32[2,16,36], index: 0, kind: input, shape index: {}]
  %s1 = inlined_call_operand.hbm [shape: bf16[16,48], index: 1, kind: input, shape index: {}]
  %s2 = inlined_call_operand.vmem [shape: f32[16,1], index: 2, kind: input, shape index: {}]
  %s3 = inlined_call_operand.hbm [shape: bf16[16,48], index: 3, kind: input, shape index: {}]
  %s4 = inlined_call_operand.vmem [shape: f32[16,1], index: 4, kind: input, shape index: {}]
  %s5 = inlined_call_operand.hbm [shape: f32[2,16,32], index: 5, kind: output, shape index: {}]
  %s6 = sld [smem:[#allocation0]]
  $region61: #{tpu_custom_call.1} parent=0
    _
  %s8 = ssub.s32 1, %s6
  %s9 = scalar_select 0, %s8, %s6
  $region1: #{tpu_custom_call.1} parent=0
    #allocation2 [shape = 'u8[4096]{0}', space=vmem, size = 0x1000, scoped, tag = 'input window, operand 1, single buffered']
    #allocation3 [shape = 's32[2]{0}', space=sflag, size = 0x8, scoped, tag = 'scoped memory for tpu_custom_call.1']
    #allocation4 [shape = 's32[2]{0}', space=sflag, size = 0x8, scoped, tag = 'scoped memory for tpu_custom_call.1']
    #allocation5 [shape = 'u8[4096]{0}', space=vmem, size = 0x1000, scoped, tag = 'input window, operand 3, single buffered']
    #allocation6 [shape = 's32[1]{0}', space=sflag, size = 0x4, scoped, tag = 'scoped memory for tpu_custom_call.1']
    #allocation7 [shape = 'u8[16384]{0}', space=vmem, size = 0x4000, scoped, tag = 'output window, operand 0']
    %10 = vsyncpa [#allocation3], 0
    %11 = vsyncpa [#allocation6], 0
    %12 = vsyncpa [#allocation4], 0
    %s13 = scalar_lea.sflag [#allocation4], 1
    %14 = vsyncpa %s13, 0
    loop: start=0, step=1, limit=4
    $region2: #{tpu_custom_call.1} parent=1 // loop_pre_header
      _
    $region3: #{tpu_custom_call.1} parent=1 // loop_header
      %s16 = sphi 0, %s20
      %p17 = scmp.ge.s32.totalorder %s16, 4
      %s26 = sphi 0, %s28
      %s29 = sphi 0, %s26
      %s30 = sphi 0, %s29
      %s46 = sphi 0, %s30
      %s50 = sphi 0, %s50
      %s52 = sphi 0, %s50
      %s53 = sphi 0, %s52
      %s67 = sphi 0, %s53
      %s71 = sphi 0, %s71
      %s73 = sphi 0, %s71
      %s74 = sphi 0, %s73
      %s88 = sphi 0, %s74
      %s92 = sphi 0, %s92
      %s94 = sphi 0, %s92
      %s95 = sphi 0, %s94
      %s109 = sphi 0, %s95
      %s113 = sphi 0, %s113
      %s115 = sphi 0, %s113
      %s116 = sphi 0, %s115
      %s130 = sphi 0, %s116
      %s136 = sphi 0, %s138
      %s139 = sphi 0, %s136
      %s140 = sphi 0, %s139
      %s156 = sphi 0, %s140
    $region4: #{tpu_custom_call.1} parent=1 // loop_header_branch
      %19 = sbr.rel (%p17) target = $region8
    $region5: #{tpu_custom_call.1} parent=1 // loop_body
      %s21 = ssub.s32 %s16, 1
      %s22 = ssub.s32 %s16, 2
      %s23 = sadd.s32 %s16, 1
      %s24 = ssub.s32 %s16, %s23
      %p25 = scmp.eq.s32.totalorder %s24, 0
      %s27 = sadd.s32 %s26, 1
      %s28 = scalar_select %p25, %s26, %s27
      %p31 = pneg %p25
      %p32 = scmp.eq.s32.totalorder %s16, 1
      %p33 = por %p31, %p32
      %p34 = scmp.ne.s32.totalorder %s26, %s29
      %p35 = scmp.eq.s32.totalorder %s16, 0
      %p36 = por %p34, %p35
      %p37 = scmp.ne.s32.totalorder %s26, %s29
      %p38 = scmp.eq.s32.totalorder %s21, 1
      %p39 = por %p37, %p38
      %p40 = scmp.ne.s32.totalorder %s29, %s30
      %p41 = scmp.eq.s32.totalorder %s21, 0
      %p42 = por %p40, %p41
      %p43 = scmp.ne.s32.totalorder %s29, %s30
      %p44 = scmp.eq.s32.totalorder %s22, 1
      %p45 = por %p43, %p44
      %p47 = scmp.ne.s32.totalorder %s30, %s46
      %p48 = scmp.eq.s32.totalorder %s22, 0
      %p49 = por %p47, %p48
      %s51 = sadd.s32 %s50, 1
      %p54 = scmp.eq.s32.totalorder %s16, 1
      %p55 = scmp.ne.s32.totalorder %s50, %s52
      %p56 = scmp.eq.s32.totalorder %s16, 0
      %p57 = por %p55, %p56
      %p58 = scmp.ne.s32.totalorder %s50, %s52
      %p59 = scmp.eq.s32.totalorder %s21, 1
      %p60 = por %p58, %p59
      %p61 = scmp.ne.s32.totalorder %s52, %s53
      %p62 = scmp.eq.s32.totalorder %s21, 0
      %p63 = por %p61, %p62
      %p64 = scmp.ne.s32.totalorder %s52, %s53
      %p65 = scmp.eq.s32.totalorder %s22, 1
      %p66 = por %p64, %p65
      %p68 = scmp.ne.s32.totalorder %s53, %s67
      %p69 = scmp.eq.s32.totalorder %s22, 0
      %p70 = por %p68, %p69
      %s72 = sadd.s32 %s71, 1
      %p75 = scmp.eq.s32.totalorder %s16, 1
      %p76 = scmp.ne.s32.totalorder %s71, %s73
      %p77 = scmp.eq.s32.totalorder %s16, 0
      %p78 = por %p76, %p77
      %p79 = scmp.ne.s32.totalorder %s71, %s73
      %p80 = scmp.eq.s32.totalorder %s21, 1
      %p81 = por %p79, %p80
      %p82 = scmp.ne.s32.totalorder %s73, %s74
      %p83 = scmp.eq.s32.totalorder %s21, 0
      %p84 = por %p82, %p83
      %p85 = scmp.ne.s32.totalorder %s73, %s74
      %p86 = scmp.eq.s32.totalorder %s22, 1
      %p87 = por %p85, %p86
      %p89 = scmp.ne.s32.totalorder %s74, %s88
      %p90 = scmp.eq.s32.totalorder %s22, 0
      %p91 = por %p89, %p90
      %s93 = sadd.s32 %s92, 1
      %p96 = scmp.eq.s32.totalorder %s16, 1
      %p97 = scmp.ne.s32.totalorder %s92, %s94
      %p98 = scmp.eq.s32.totalorder %s16, 0
      %p99 = por %p97, %p98
      %p100 = scmp.ne.s32.totalorder %s92, %s94
      %p101 = scmp.eq.s32.totalorder %s21, 1
      %p102 = por %p100, %p101
      %p103 = scmp.ne.s32.totalorder %s94, %s95
      %p104 = scmp.eq.s32.totalorder %s21, 0
      %p105 = por %p103, %p104
      %p106 = scmp.ne.s32.totalorder %s94, %s95
      %p107 = scmp.eq.s32.totalorder %s22, 1
      %p108 = por %p106, %p107
      %p110 = scmp.ne.s32.totalorder %s95, %s109
      %p111 = scmp.eq.s32.totalorder %s22, 0
      %p112 = por %p110, %p111
      %s114 = sadd.s32 %s113, 1
      %p117 = scmp.eq.s32.totalorder %s16, 1
      %p118 = scmp.ne.s32.totalorder %s113, %s115
      %p119 = scmp.eq.s32.totalorder %s16, 0
      %p120 = por %p118, %p119
      %p121 = scmp.ne.s32.totalorder %s113, %s115
      %p122 = scmp.eq.s32.totalorder %s21, 1
      %p123 = por %p121, %p122
      %p124 = scmp.ne.s32.totalorder %s115, %s116
      %p125 = scmp.eq.s32.totalorder %s21, 0
      %p126 = por %p124, %p125
      %p127 = scmp.ne.s32.totalorder %s115, %s116
      %p128 = scmp.eq.s32.totalorder %s22, 1
      %p129 = por %p127, %p128
      %p131 = scmp.ne.s32.totalorder %s116, %s130
      %p132 = scmp.eq.s32.totalorder %s22, 0
      %p133 = por %p131, %p132
      %s134 = ssub.s32 %s16, %s23
      %p135 = scmp.eq.s32.totalorder %s134, 0
      %s137 = sadd.s32 %s136, 1
      %s138 = scalar_select %p135, %s136, %s137
      %p141 = pneg %p135
      %p142 = scmp.eq.s32.totalorder %s16, 1
      %p143 = por %p141, %p142
      %p144 = scmp.ne.s32.totalorder %s136, %s139
      %p145 = scmp.eq.s32.totalorder %s16, 0
      %p146 = por %p144, %p145
      %p147 = scmp.ne.s32.totalorder %s136, %s139
      %p148 = scmp.eq.s32.totalorder %s21, 1
      %p149 = por %p147, %p148
      %p150 = scmp.ne.s32.totalorder %s139, %s140
      %p151 = scmp.eq.s32.totalorder %s21, 0
      %p152 = por %p150, %p151
      %p153 = scmp.ne.s32.totalorder %s139, %s140
      %p154 = scmp.eq.s32.totalorder %s22, 1
      %p155 = por %p153, %p154
      %p157 = scmp.ne.s32.totalorder %s140, %s156
      %p158 = scmp.eq.s32.totalorder %s22, 0
      %p159 = por %p157, %p158
      %p160 = scmp.le.s32.totalorder 1, %s16
      %p161 = scmp.lt.s32.totalorder %s16, 3
      %p162 = pnand %p160, %p161
      %p163 = pneg %p162
      // Predicated region
      $region9: #{tpu_custom_call.1} parent=5 // pred_check
        _
      $region10: #{tpu_custom_call.1} parent=5 // pred_check_branch
        %165 = sbr.rel (%p162) target = $region12
      $region11: #{tpu_custom_call.1} parent=5 // pred_region
        %s166 = ssub.s32 %s16, 1
        // Predicated region
        $region13: #{tpu_custom_call.1} parent=11 // pred_check
          %p167 = pneg %p63
        $region14: #{tpu_custom_call.1} parent=11 // pred_check_branch
          %169 = sbr.rel (%p167) target = $region16
        $region15: #{tpu_custom_call.1} parent=11 // pred_region
          %171 = vsyncadd [#allocation3], 0
          %s172 = sshll.u32 %s1, 4
          %s173 = int_to_ptr.hbm [resolvable:$true] %s172
          %s174 = sshll.u32 [#allocation2], 4
          %s175 = int_to_ptr.vmem [resolvable:$true] %s174
          %180 = dma.hbm_to_vmem [thread:$0]  %s173, 128, %s175, [#allocation3], 64, 64, 4
        $region16: #{tpu_custom_call.1} parent=11 // pred_fallthru
          _
        // Predicated region
        $region17: #{tpu_custom_call.1} parent=11 // pred_check
          %p181 = pneg %p84
        $region18: #{tpu_custom_call.1} parent=11 // pred_check_branch
          %183 = sbr.rel (%p181) target = $region20
        $region19: #{tpu_custom_call.1} parent=11 // pred_region
          _
        $region20: #{tpu_custom_call.1} parent=11 // pred_fallthru
          _
        // Predicated region
        $region21: #{tpu_custom_call.1} parent=11 // pred_check
          %p184 = pneg %p105
        $region22: #{tpu_custom_call.1} parent=11 // pred_check_branch
          %186 = sbr.rel (%p184) target = $region24
        $region23: #{tpu_custom_call.1} parent=11 // pred_region
          %188 = vsyncadd [#allocation6], 0
          %s189 = sshll.u32 %s3, 4
          %s190 = int_to_ptr.hbm [resolvable:$true] %s189
          %s191 = sshll.u32 [#allocation5], 4
          %s192 = int_to_ptr.vmem [resolvable:$true] %s191
          %197 = dma.hbm_to_vmem [thread:$0]  %s190, 128, %s192, [#allocation6], 64, 64, 4
        $region24: #{tpu_custom_call.1} parent=11 // pred_fallthru
          _
        // Predicated region
        $region25: #{tpu_custom_call.1} parent=11 // pred_check
          %p198 = pneg %p126
        $region26: #{tpu_custom_call.1} parent=11 // pred_check_branch
          %200 = sbr.rel (%p198) target = $region28
        $region27: #{tpu_custom_call.1} parent=11 // pred_region
          _
        $region28: #{tpu_custom_call.1} parent=11 // pred_fallthru
          _
      $region12: #{tpu_custom_call.1} parent=5 // pred_fallthru
        _
      %p201 = scmp.lt.s32.totalorder %s16, 2
      // Predicated region
      $region29: #{tpu_custom_call.1} parent=5 // pred_check
        %p202 = pneg %p201
      $region30: #{tpu_custom_call.1} parent=5 // pred_check_branch
        %204 = sbr.rel (%p202) target = $region32
      $region31: #{tpu_custom_call.1} parent=5 // pred_region
        // Predicated region
        $region33: #{tpu_custom_call.1} parent=31 // pred_check
          %p205 = pneg %p36
        $region34: #{tpu_custom_call.1} parent=31 // pred_check_branch
          %207 = sbr.rel (%p205) target = $region36
        $region35: #{tpu_custom_call.1} parent=31 // pred_region
          %p208 = scmp.lt.s32.totalorder %s16, 1
          %s209 = scalar_select %p208, %s16, 1
          %s210 = smul.addr %s209, 2
          %s211 = smul.addr %s210, 8
          %s212 = scalar_lea.vmem %s0, %s211
        $region36: #{tpu_custom_call.1} parent=31 // pred_fallthru
          _
      $region32: #{tpu_custom_call.1} parent=5 // pred_fallthru
        _
      %p213 = scmp.le.s32.totalorder 1, %s16
      %p214 = scmp.lt.s32.totalorder %s16, 3
      %p215 = pnand %p213, %p214
      %p216 = pneg %p215
      // Predicated region
      $region37: #{tpu_custom_call.1} parent=5 // pred_check
        _
      $region38: #{tpu_custom_call.1} parent=5 // pred_check_branch
        %218 = sbr.rel (%p215) target = $region40
      $region39: #{tpu_custom_call.1} parent=5 // pred_region
        %s219 = ssub.s32 %s16, 1
        // Predicated region
        $region41: #{tpu_custom_call.1} parent=39 // pred_check
          %p220 = pneg %p63
        $region42: #{tpu_custom_call.1} parent=39 // pred_check_branch
          %222 = sbr.rel (%p220) target = $region44
        $region43: #{tpu_custom_call.1} parent=39 // pred_region
          %224 = dma.done [#allocation3], 128
        $region44: #{tpu_custom_call.1} parent=39 // pred_fallthru
          _
        // Predicated region
        $region45: #{tpu_custom_call.1} parent=39 // pred_check
          %p225 = pneg %p105
        $region46: #{tpu_custom_call.1} parent=39 // pred_check_branch
          %227 = sbr.rel (%p225) target = $region48
        $region47: #{tpu_custom_call.1} parent=39 // pred_region
          %229 = dma.done [#allocation6], 128
        $region48: #{tpu_custom_call.1} parent=39 // pred_fallthru
          _
        %p230 = scmp.lt.s32.totalorder %s21, 1
        %s231 = scalar_select %p230, %s21, 1
        %s232 = smul.addr %s231, 2
        %s233 = smul.addr %s232, 8
        %s234 = scalar_lea.vmem %s0, %s233
        %p235 = pneg %p42
        %p236 = pneg %p39
        %p237 = pneg %p63
        %p238 = pneg %p60
        %p239 = pneg %p84
        %p240 = pneg %p81
        %p241 = pneg %p105
        %p242 = pneg %p102
        %p243 = pneg %p126
        %p244 = pneg %p123
        %p245 = pneg %p152
        %p246 = pneg %p149
        %s247 = sand.u32 %s139, 1
        %s248 = scalar_lea.sflag [#allocation4], %s247
        %s249 = sand.u32 %s139, 1
        %s250 = smul.addr %s249, 16
        %s251 = scalar_lea.vmem [#allocation7], %s250
        %p252 = scmp.lt.s32.totalorder %s21, 1
        %s253 = scalar_select %p252, %s21, 1
        %s254 = smul.addr %s253, 2
        %s255 = smul.addr %s254, 8
        %s256 = scalar_lea.vmem %s0, %s255
        %v258 = vld [vmem:[%s256] sm:$0xff]
        %v259 = vld [vmem:[%s256 + $0x8] sm:$0xff]
        %262 = vrot.lane.b32.xlu0 %v258, 127
        %v263 = vpop.permute.xlu0 %262
        %264 = vrot.lane.b32.xlu0 %v259, 127
        %v265 = vpop.permute.xlu0 %264
        %268 = vrot.lane.b32.xlu0 %v258, 126
        %v269 = vpop.permute.xlu0 %268
        %270 = vrot.lane.b32.xlu0 %v259, 126
        %v271 = vpop.permute.xlu0 %270
        %v274 = vpack.c.bf16 %v259, %v258
        %v275 = vpack.c.bf16 %v265, %v263
        %v276 = vpack.c.bf16 %v271, %v269
        %v277 = vld [vmem:[#allocation2] sm:$0xf]
        %v278 = vld [vmem:[#allocation2 + $0x4] sm:$0xf]
        %v279 = vld [vmem:[%s2] sm:$0xff]
        %v280 = vld [vmem:[%s2 + $0x8] sm:$0xff]
        %282 = vset.pattern.permute.xlu0 0
        %283 = vperm.xlu0 %282, %v279
        %v284 = vpop.permute.xlu0 %283
        %287 = vset.pattern.permute.xlu0 0
        %288 = vperm.xlu0 %287, %v280
        %v289 = vpop.permute.xlu0 %288
        %v293 = vunpack.c.l.b16 %v277
        %v294 = vunpack.c.l.b16 %v278
        %v295 = vpack.c.b16 %v294, %v293
        %vm296 = vcmask 392192
        %v298 = vsel %vm296, %v295, 0
        %300 = vmatpush.bf16.msra.mxu0 0
        %301 = vmatpush.bf16.msra.mxu0 0
        %302 = vmatpush.bf16.msra.mxu0 0
        %303 = vmatpush.bf16.msra.mxu0 0
        %304 = vmatpush.bf16.msra.mxu0 0
        %305 = vmatpush.bf16.msra.mxu0 %v276
        %306 = vmatpush.bf16.msra.mxu0 %v275
        %307 = vmatpush.bf16.msra.mxu0 %v274
        %308 = vmatmul.bf16.gmra.mxu0 %v298
        %v309 = vpop.f32.mrf.mxu0
        %v310 = vadd.f32 %v284, %v309
        %v311 = vpop.f32.mrf.mxu0
        %v312 = vadd.f32 %v289, %v311
        %313 = vdwg.mxu0
        %v314 = vmax.f32 %v310, 0.0
        %v315 = vmax.f32 %v312, 0.0
        %v316 = vlaneseq
        %v317 = vand.u32 %v316, 127
        %vm318 = vcmp.eq.s32.totalorder %v317, 0
        %vm319 = vcmp.eq.s32.totalorder %v317, 33
        %vm320 = vmor %vm318, %vm319
        %v321 = vsel %vm320, 0.0, %v314
        %v322 = vsel %vm320, 0.0, %v315
        %325 = vrot.lane.b32.xlu0 %v321, 127
        %v326 = vpop.permute.xlu0 %325
        %327 = vrot.lane.b32.xlu0 %v322, 127
        %v328 = vpop.permute.xlu0 %327
        %331 = vrot.lane.b32.xlu0 %v321, 126
        %v332 = vpop.permute.xlu0 %331
        %333 = vrot.lane.b32.xlu0 %v322, 126
        %v334 = vpop.permute.xlu0 %333
        %v337 = vpack.c.bf16 %v322, %v321
        %v338 = vpack.c.bf16 %v328, %v326
        %v339 = vpack.c.bf16 %v334, %v332
        %v340 = vld [vmem:[#allocation5] sm:$0xf]
        %v341 = vld [vmem:[#allocation5 + $0x4] sm:$0xf]
        %v342 = vld [vmem:[%s4] sm:$0xff]
        %v343 = vld [vmem:[%s4 + $0x8] sm:$0xff]
        %345 = vset.pattern.permute.xlu0 0
        %346 = vperm.xlu0 %345, %v342
        %v347 = vpop.permute.xlu0 %346
        %350 = vset.pattern.permute.xlu0 0
        %351 = vperm.xlu0 %350, %v343
        %v352 = vpop.permute.xlu0 %351
        %v356 = vunpack.c.l.b16 %v340
        %v357 = vunpack.c.l.b16 %v341
        %v358 = vpack.c.b16 %v357, %v356
        %v360 = vsel %vm296, %v358, 0
        %362 = vmatpush.bf16.msra.mxu0 0
        %363 = vmatpush.bf16.msra.mxu0 0
        %364 = vmatpush.bf16.msra.mxu0 0
        %365 = vmatpush.bf16.msra.mxu0 0
        %366 = vmatpush.bf16.msra.mxu0 0
        %367 = vmatpush.bf16.msra.mxu0 %v339
        %368 = vmatpush.bf16.msra.mxu0 %v338
        %369 = vmatpush.bf16.msra.mxu0 %v337
        %370 = vmatmul.bf16.gmra.mxu0 %v360
        %v371 = vpop.f32.mrf.mxu0
        %v372 = vadd.f32 %v347, %v371
        %v373 = vpop.f32.mrf.mxu0
        %v374 = vadd.f32 %v352, %v373
        %375 = vdwg.mxu0
        %v376 = vadd.f32 %v372, %v269
        %v377 = vadd.f32 %v374, %v271
        %v378 = vmax.f32 %v376, 0.0
        %v379 = vmax.f32 %v377, 0.0
        %vm380 = vcmask 261120
        %381 = vst.msk [vmem:[%s251] sm:$0xff] %vm380, %v378
        %382 = vst.msk [vmem:[%s251 + $0x8] sm:$0xff] %vm380, %v379
        %s383 = sand.u32 %s139, 1
        %s384 = scalar_lea.sflag [#allocation4], %s383
        %s385 = sand.u32 %s139, 1
        %s386 = smul.addr %s385, 16
        %s387 = scalar_lea.vmem [#allocation7], %s386
        // Predicated region
        $region49: #{tpu_custom_call.1} parent=39 // pred_check
          %p388 = pneg %p149
        $region50: #{tpu_custom_call.1} parent=39 // pred_check_branch
          %390 = sbr.rel (%p388) target = $region52
        $region51: #{tpu_custom_call.1} parent=39 // pred_region
          %392 = vsyncadd %s384, 0
          %s393 = smul.addr %s21, 2
          %s394 = smul.addr %s393, 8
          %s395 = scalar_lea.hbm %s5, %s394
          %s396 = sshll.u32 %s387, 4
          %s397 = int_to_ptr.vmem [resolvable:$true] %s396
          %s398 = sshll.u32 %s395, 4
          %s399 = int_to_ptr.hbm [resolvable:$true] %s398
          %404 = dma.vmem_to_hbm [thread:$0]  %s397, 256, %s399, %s384, 128, 128, 8
        $region52: #{tpu_custom_call.1} parent=39 // pred_fallthru
          _
      $region40: #{tpu_custom_call.1} parent=5 // pred_fallthru
        _
      %p405 = scmp.le.s32.totalorder 2, %s16
      // Predicated region
      $region53: #{tpu_custom_call.1} parent=5 // pred_check
        %p406 = pneg %p405
      $region54: #{tpu_custom_call.1} parent=5 // pred_check_branch
        %408 = sbr.rel (%p406) target = $region56
      $region55: #{tpu_custom_call.1} parent=5 // pred_region
        %s409 = ssub.s32 %s16, 2
        // Predicated region
        $region57: #{tpu_custom_call.1} parent=55 // pred_check
          %p410 = pneg %p155
        $region58: #{tpu_custom_call.1} parent=55 // pred_check_branch
          %412 = sbr.rel (%p410) target = $region60
        $region59: #{tpu_custom_call.1} parent=55 // pred_region
          %s413 = sand.u32 %s140, 1
          %s414 = scalar_lea.sflag [#allocation4], %s413
          %s415 = sand.u32 %s140, 1
          %s416 = smul.addr %s415, 16
          %s417 = scalar_lea.vmem [#allocation7], %s416
          %419 = dma.done %s414, 256
        $region60: #{tpu_custom_call.1} parent=55 // pred_fallthru
          _
      $region56: #{tpu_custom_call.1} parent=5 // pred_fallthru
        _
    $region6: #{tpu_custom_call.1} parent=1 // loop_footer
      %s20 = sadd.s32 1, %s16
    $region7: #{tpu_custom_call.1} parent=1 // loop_footer_branch
      %15 = sbr.rel target = $region3
    $region8: #{tpu_custom_call.1} parent=1 // loop_exit
      _
    %420 = vsyncpa [#allocation3], 1
    %s421 = scalar_lea.sflag [#allocation3], 1
    %422 = vsyncpa %s421, 1
    %423 = vsyncpa [#allocation6], 1
    %424 = vsyncpa [#allocation4], 1
    %s425 = scalar_lea.sflag [#allocation4], 1
    %426 = vsyncpa %s425, 1

</llo_original>
